<compile_context>
chip_gen: v7x
topology: tpu7x:2x2x1
jax: 0.10.0
libtpu: 0.0.40
codegen_flags: <defaults>
</compile_context>

<pallas_src>
import jax
import jax.numpy as jnp
import numpy as np
from jax.experimental import pallas as pl
from jax.experimental.pallas import tpu as pltpu

# ----------------------------- configuration --------------------------------
N_BATCH = 2          # batch
KBINS   = 4          # number of scene-adaptive bin sets (module arg kbins)
DBINS   = 64         # number of depth bins per set (dout)
IMG_H = IMG_W = 32   # input spatial size (NCHW, 3 channels)
C1, C2, C3, C4 = 16, 32, 64, 128   # stand-in backbone channels per stage


# =============================================================================
# Fused kernel: SM4Depth.forward() bin mixing + decoder depth head.
#
#   w       = softmax(w, dim=1)                       # (N, K)
#   bins    = pad(bins, (1, 0), value=0.01)           # (K, N, D+1)
#   bins    = cumsum(permute(bins, (1,0,2)), dim=2)
#   mix     = sum(bins * w[..., None], dim=1)         # (N, D+1)
#   centers = 0.5 * (mix[:, :-1] + mix[:, 1:])        # (N, D)
#
# Because cumsum is linear, the k-mix is applied to the raw bin widths first
# (b_mix), then a single strict-triangular matmul gives the exclusive cumsum;
# inclusive = exclusive + b_mix, and the 0.01 pad contributes 0.01*sum_k(w).
#
#   depth head: logits = x @ Wc + b ; probs = softmax(logits, -1)
#               depth  = sum(probs * centers[batch], -1)
# =============================================================================
def sm4depth_fused_kernel(bins_ref, w_ref, x_ref, wc_ref, hb_ref, tri_ref,
                          depth_ref, centers_ref, wsoft_ref):
    K, N, D = bins_ref.shape
    NP, _ = x_ref.shape
    P = NP // N

    # --- scene-weight softmax (torch: F.softmax(w, dim=1)) -------------------
    w = w_ref[...]                                            # (N, K)
    w = w - jnp.max(w, axis=1, keepdims=True)
    e = jnp.exp(w)
    wsoft = e / jnp.sum(e, axis=1, keepdims=True)             # (N, K)
    wsoft_ref[...] = wsoft

    # --- mix bin widths over k BEFORE the cumsum (cumsum is linear) ----------
    b = bins_ref[...]                                         # (K, N, D)
    b_mix = wsoft[:, 0:1] * b[0]
    for k in range(1, K):                                     # K static & tiny
        b_mix = b_mix + wsoft[:, k:k + 1] * b[k]              # (N, D)

    # --- single exclusive-cumsum matmul; inclusive = exclusive + b_mix -------
    s_excl = jnp.dot(b_mix, tri_ref[...], preferred_element_type=jnp.float32)
    base = 0.01 * jnp.sum(wsoft, axis=1, keepdims=True)       # 0.01 left-pad term
    centers = base + s_excl + 0.5 * b_mix                     # = base + 0.5*(excl+incl)
    centers_ref[...] = centers

    # --- depth head: 1x1 conv -> per-pixel softmax over bins -> expectation --
    logits = jnp.dot(x_ref[...], wc_ref[...],
                     preferred_element_type=jnp.float32) + hb_ref[...]  # (N*P, D)
    m = jnp.max(logits, axis=-1, keepdims=True)
    p = jnp.exp(logits - m)
    probs = p / jnp.sum(p, axis=-1, keepdims=True)            # (N*P, D)
    probs = probs.reshape(N, P, D)                            # split sublane dim (tile-safe)
    depth_ref[...] = jnp.sum(probs * centers[:, None, :], axis=-1)   # (N, P), lane-major


def sm4depth_hot_path(bins_knd, w_nk, x_npc, head_w, head_b):
    """bins_knd: (K, N, D); w_nk: (N, K); x_npc: (N, P, Cin).
    Returns depth (N, P), centers (N, D), w_soft (N, K)."""
    K, N, D = bins_knd.shape
    _, P, Cin = x_npc.shape
    # strictly-lower triangular (r < c) matrix: exclusive cumsum via one matmul
    tri_excl = (jnp.arange(D)[:, None] < jnp.arange(D)[None, :]).astype(jnp.float32)

    vmem = pl.BlockSpec(memory_space=pltpu.MemorySpace.VMEM)
    return pl.pallas_call(
        sm4depth_fused_kernel,
        out_shape=(jax.ShapeDtypeStruct((N, P), jnp.float32),
                   jax.ShapeDtypeStruct((N, D), jnp.float32),
                   jax.ShapeDtypeStruct((N, K), jnp.float32)),
        in_specs=[vmem, vmem, vmem, vmem, vmem, vmem],
        out_specs=(vmem, vmem, vmem),
    )(bins_knd.astype(jnp.float32),
      w_nk.astype(jnp.float32),
      x_npc.reshape(N * P, Cin).astype(jnp.float32),
      head_w.astype(jnp.float32),
      head_b.astype(jnp.float32),
      tri_excl)


# =============================================================================
# Deterministic parameters + stand-in feature extractors (plain-JAX glue).
# =============================================================================
def make_params():
    keys = jax.random.split(jax.random.PRNGKey(0), 8)
    d = lambda k, fi, fo: 0.05 * jax.random.normal(k, (fi, fo), jnp.float32)
    return dict(
        patch=d(keys[0], 4 * 4 * 3, C1),
        s2=d(keys[1], C1, C2),
        s3=d(keys[2], C2, C3),
        s4=d(keys[3], C3, C4),
        pst_bins=d(keys[4], C4, KBINS * DBINS),
        pst_w=d(keys[5], C4, KBINS),
        head_w=d(keys[6], C1, DBINS),
        head_b=0.05 * jax.random.normal(keys[7], (1, DBINS), jnp.float32),
    )


def standin_backbone(imgs_nchw, params):
    # TODO(synk): SwinTransformer source not provided; deterministic patch-embed
    # + pooled-projection stand-in producing 4 feature maps at /4,/8,/16,/32.
    x = jnp.transpose(imgs_nchw, (0, 2, 3, 1))                      # NHWC
    n, h, w, c = x.shape
    p = 4
    x = x.reshape(n, h // p, p, w // p, p, c)
    x = x.transpose(0, 1, 3, 2, 4, 5).reshape(n, h // p, w // p, p * p * c)
    f1 = jnp.tanh(x @ params['patch'])                              # (N, 8, 8, C1)

    def down(f, wmat):
        nb, hh, ww, cc = f.shape
        f = f.reshape(nb, hh // 2, 2, ww // 2, 2, cc).mean(axis=(2, 4))
        return jnp.tanh(f @ wmat)

    f2 = down(f1, params['s2'])                                     # (N, 4, 4, C2)
    f3 = down(f2, params['s3'])                                     # (N, 2, 2, C3)
    f4 = down(f3, params['s4'])                                     # (N, 1, 1, C4)
    return [f1, f2, f3, f4]


def standin_pst(f4, params):
    # TODO(synk): PyramidSceneTransformer source not provided; global-pool +
    # linear heads emit bins (KBINS, N, DBINS) and scene logits w (N, KBINS).
    n = f4.shape[0]
    gap = f4.mean(axis=(1, 2))                                      # (N, C4)
    bins = jax.nn.softplus(gap @ params['pst_bins'])                # (N, K*D)
    bins = bins.reshape(n, KBINS, DBINS).transpose(1, 0, 2)         # (K, N, D)
    w = gap @ params['pst_w']                                       # (N, K)
    return bins, f4, w


def sm4depth_forward(imgs_nchw, params):
    feats = standin_backbone(imgs_nchw, params)
    bins, f4, w = standin_pst(feats[-1], params)

    # --- decoder head input ---
    # TODO(synk): HSC_Decoder (skip connections + bilinear upsampling) source
    # not provided; depth head runs on the /4 feature map.
    n, h1, w1, _ = feats[0].shape
    x_npc = feats[0].reshape(n, h1 * w1, C1)                        # (N, P, C1)

    # --- fused hot path: bin mixing + centers + depth head (one pallas_call) ---
    depth, centers, w_soft = sm4depth_hot_path(
        bins, w, x_npc, params['head_w'], params['head_b'])

    out = depth.reshape(n, 1, h1, w1)                               # NCHW depth map
    centers_out = centers.reshape(n, DBINS, 1, 1)                   # torch .view(n,dout,1,1)
    return out, centers_out, w_soft, (bins, w, x_npc)               # extras for checking


# =============================================================================
# Main
# =============================================================================
if __name__ == "__main__":
    params = make_params()
    imgs = jax.random.normal(jax.random.PRNGKey(0),
                             (N_BATCH, 3, IMG_H, IMG_W), jnp.float32)

    out, centers, w_soft, (bins, w_raw, x_npc) = sm4depth_forward(imgs, params)
    jax.block_until_ready((out, centers, w_soft))

    # ---- pure-JAX reference for the torch-written forward() math ----
    w_ref = jax.nn.softmax(w_raw, axis=1)                           # (N, K)
    b_pad = jnp.pad(bins, ((0, 0), (0, 0), (1, 0)), constant_values=0.01)
    b_pad = jnp.transpose(b_pad, (1, 0, 2))                         # (N, K, D+1)
    b_cum = jnp.cumsum(b_pad, axis=2)
    mix = jnp.sum(b_cum * w_ref[..., None], axis=1)                 # (N, D+1)
    centers_ref = 0.5 * (mix[:, :-1] + mix[:, 1:])                  # (N, D)

    np.testing.assert_allclose(np.asarray(w_soft), np.asarray(w_ref),
                               rtol=1e-5, atol=1e-5)
    np.testing.assert_allclose(np.asarray(centers.reshape(N_BATCH, DBINS)),
                               np.asarray(centers_ref), rtol=1e-4, atol=1e-5)

    # ---- reference for the depth head ----
    logits_ref = jnp.einsum('npc,cd->npd', x_npc, params['head_w']) + params['head_b']
    probs_ref = jax.nn.softmax(logits_ref, axis=-1)
    depth_ref = jnp.sum(probs_ref * centers_ref[:, None, :], axis=-1)
    np.testing.assert_allclose(np.asarray(out.reshape(N_BATCH, -1)),
                               np.asarray(depth_ref), rtol=1e-4, atol=1e-5)

    assert out.shape == (N_BATCH, 1, IMG_H // 4, IMG_W // 4)
    assert centers.shape == (N_BATCH, DBINS, 1, 1)
    assert w_soft.shape == (N_BATCH, KBINS)

    print("KERNEL_OK")
</pallas_src>

<mosaic_0001>
module attributes {stable_mosaic.version = 11 : i64} {
  func.func @sm4depth_fused_kernel(%arg0: memref<4x2x64xf32, #tpu.memory_space<vmem>>, %arg1: memref<2x4xf32, #tpu.memory_space<vmem>>, %arg2: memref<128x16xf32, #tpu.memory_space<vmem>>, %arg3: memref<16x64xf32, #tpu.memory_space<vmem>>, %arg4: memref<1x64xf32, #tpu.memory_space<vmem>>, %arg5: memref<64x64xf32, #tpu.memory_space<vmem>>, %arg6: memref<2x64xf32, #tpu.memory_space<vmem>>, %arg7: memref<2x64xf32, #tpu.memory_space<vmem>>, %arg8: memref<2x4xf32, #tpu.memory_space<vmem>>) attributes {dimension_semantics = [], scalar_prefetch = 0 : i64, scratch_operands = 0 : i64, tpu.core_type = #tpu.core_type<tc>} {
    %c0 = arith.constant 0 : index
    %c0_0 = arith.constant 0 : index
    %0 = vector.load %arg1[%c0, %c0_0] : memref<2x4xf32, #tpu.memory_space<vmem>>, vector<2x4xf32>
    %cst = arith.constant dense<0xFF800000> : vector<2xf32>
    %1 = vector.multi_reduction <maximumf>, %0, %cst [1] : vector<2x4xf32> to vector<2xf32>
    %2 = vector.shape_cast %1 : vector<2xf32> to vector<2x1xf32>
    %3 = vector.broadcast %2 : vector<2x1xf32> to vector<2x4xf32>
    %4 = arith.subf %0, %3 : vector<2x4xf32>
    %5 = math.exp %4 : vector<2x4xf32>
    %cst_1 = arith.constant dense<0.000000e+00> : vector<2xf32>
    %6 = vector.multi_reduction <add>, %5, %cst_1 [1] : vector<2x4xf32> to vector<2xf32>
    %7 = vector.shape_cast %6 : vector<2xf32> to vector<2x1xf32>
    %8 = vector.broadcast %7 : vector<2x1xf32> to vector<2x4xf32>
    %9 = arith.divf %5, %8 : vector<2x4xf32>
    %c0_2 = arith.constant 0 : index
    %c0_3 = arith.constant 0 : index
    %10 = vector.load %arg8[%c0_2, %c0_3] : memref<2x4xf32, #tpu.memory_space<vmem>>, vector<2x4xf32>
    tpu.vector_store %arg8[%c0_2, %c0_3], %9 {strides = array<i32>} : memref<2x4xf32, #tpu.memory_space<vmem>>, vector<2x4xf32>,
    %c0_4 = arith.constant 0 : index
    %c0_5 = arith.constant 0 : index
    %c0_6 = arith.constant 0 : index
    %11 = vector.load %arg0[%c0_4, %c0_5, %c0_6] : memref<4x2x64xf32, #tpu.memory_space<vmem>>, vector<4x2x64xf32>
    %12 = vector.extract_strided_slice %9 {offsets = [0, 0], sizes = [2, 1], strides = [1, 1]} : vector<2x4xf32> to vector<2x1xf32>
    %13 = vector.extract_strided_slice %11 {offsets = [0, 0, 0], sizes = [1, 2, 64], strides = [1, 1, 1]} : vector<4x2x64xf32> to vector<1x2x64xf32>
    %14 = vector.shape_cast %13 : vector<1x2x64xf32> to vector<2x64xf32>
    %15 = vector.broadcast %12 : vector<2x1xf32> to vector<2x64xf32>
    %16 = arith.mulf %15, %14 : vector<2x64xf32>
    %17 = vector.extract_strided_slice %9 {offsets = [0, 1], sizes = [2, 1], strides = [1, 1]} : vector<2x4xf32> to vector<2x1xf32>
    %18 = vector.extract_strided_slice %11 {offsets = [1, 0, 0], sizes = [1, 2, 64], strides = [1, 1, 1]} : vector<4x2x64xf32> to vector<1x2x64xf32>
    %19 = vector.shape_cast %18 : vector<1x2x64xf32> to vector<2x64xf32>
    %20 = vector.broadcast %17 : vector<2x1xf32> to vector<2x64xf32>
    %21 = arith.mulf %20, %19 : vector<2x64xf32>
    %22 = arith.addf %16, %21 : vector<2x64xf32>
    %23 = vector.extract_strided_slice %9 {offsets = [0, 2], sizes = [2, 1], strides = [1, 1]} : vector<2x4xf32> to vector<2x1xf32>
    %24 = vector.extract_strided_slice %11 {offsets = [2, 0, 0], sizes = [1, 2, 64], strides = [1, 1, 1]} : vector<4x2x64xf32> to vector<1x2x64xf32>
    %25 = vector.shape_cast %24 : vector<1x2x64xf32> to vector<2x64xf32>
    %26 = vector.broadcast %23 : vector<2x1xf32> to vector<2x64xf32>
    %27 = arith.mulf %26, %25 : vector<2x64xf32>
    %28 = arith.addf %22, %27 : vector<2x64xf32>
    %29 = vector.extract_strided_slice %9 {offsets = [0, 3], sizes = [2, 1], strides = [1, 1]} : vector<2x4xf32> to vector<2x1xf32>
    %30 = vector.extract_strided_slice %11 {offsets = [3, 0, 0], sizes = [1, 2, 64], strides = [1, 1, 1]} : vector<4x2x64xf32> to vector<1x2x64xf32>
    %31 = vector.shape_cast %30 : vector<1x2x64xf32> to vector<2x64xf32>
    %32 = vector.broadcast %29 : vector<2x1xf32> to vector<2x64xf32>
    %33 = arith.mulf %32, %31 : vector<2x64xf32>
    %34 = arith.addf %28, %33 : vector<2x64xf32>
    %c0_7 = arith.constant 0 : index
    %c0_8 = arith.constant 0 : index
    %35 = vector.load %arg5[%c0_7, %c0_8] : memref<64x64xf32, #tpu.memory_space<vmem>>, vector<64x64xf32>
    %cst_9 = arith.constant dense<0.000000e+00> : vector<2x64xf32>
    %36 = tpu.matmul %34, %35, %cst_9 {dimension_numbers = #tpu.dot_dimension_numbers<[1], [0], [0], [1], [0, 0, 1, 1], [], []>} : vector<2x64xf32>, vector<64x64xf32>, vector<2x64xf32> -> vector<2x64xf32>
    %cst_10 = arith.constant dense<0.000000e+00> : vector<2xf32>
    %37 = vector.multi_reduction <add>, %9, %cst_10 [1] : vector<2x4xf32> to vector<2xf32>
    %38 = vector.shape_cast %37 : vector<2xf32> to vector<2x1xf32>
    %cst_11 = arith.constant 0.00999999977 : f32
    %39 = vector.broadcast %cst_11 : f32 to vector<2x1xf32>
    %40 = arith.mulf %39, %38 : vector<2x1xf32>
    %41 = vector.broadcast %40 : vector<2x1xf32> to vector<2x64xf32>
    %42 = arith.addf %41, %36 : vector<2x64xf32>
    %cst_12 = arith.constant 5.000000e-01 : f32
    %43 = vector.broadcast %cst_12 : f32 to vector<2x64xf32>
    %44 = arith.mulf %43, %34 : vector<2x64xf32>
    %45 = arith.addf %42, %44 : vector<2x64xf32>
    %c0_13 = arith.constant 0 : index
    %c0_14 = arith.constant 0 : index
    %46 = vector.load %arg7[%c0_13, %c0_14] : memref<2x64xf32, #tpu.memory_space<vmem>>, vector<2x64xf32>
    tpu.vector_store %arg7[%c0_13, %c0_14], %45 {strides = array<i32>} : memref<2x64xf32, #tpu.memory_space<vmem>>, vector<2x64xf32>,
    %c0_15 = arith.constant 0 : index
    %c0_16 = arith.constant 0 : index
    %47 = vector.load %arg2[%c0_15, %c0_16] : memref<128x16xf32, #tpu.memory_space<vmem>>, vector<128x16xf32>
    %c0_17 = arith.constant 0 : index
    %c0_18 = arith.constant 0 : index
    %48 = vector.load %arg3[%c0_17, %c0_18] : memref<16x64xf32, #tpu.memory_space<vmem>>, vector<16x64xf32>
    %cst_19 = arith.constant dense<0.000000e+00> : vector<128x64xf32>
    %49 = tpu.matmul %47, %48, %cst_19 {dimension_numbers = #tpu.dot_dimension_numbers<[1], [0], [0], [1], [0, 0, 1, 1], [], []>} : vector<128x16xf32>, vector<16x64xf32>, vector<128x64xf32> -> vector<128x64xf32>
    %c0_20 = arith.constant 0 : index
    %c0_21 = arith.constant 0 : index
    %50 = vector.load %arg4[%c0_20, %c0_21] : memref<1x64xf32, #tpu.memory_space<vmem>>, vector<1x64xf32>
    %51 = vector.broadcast %50 : vector<1x64xf32> to vector<128x64xf32>
    %52 = arith.addf %49, %51 : vector<128x64xf32>
    %cst_22 = arith.constant dense<0xFF800000> : vector<128xf32>
    %53 = vector.multi_reduction <maximumf>, %52, %cst_22 [1] : vector<128x64xf32> to vector<128xf32>
    %54 = vector.shape_cast %53 : vector<128xf32> to vector<128x1xf32>
    %55 = vector.broadcast %54 : vector<128x1xf32> to vector<128x64xf32>
    %56 = arith.subf %52, %55 : vector<128x64xf32>
    %57 = math.exp %56 : vector<128x64xf32>
    %cst_23 = arith.constant dense<0.000000e+00> : vector<128xf32>
    %58 = vector.multi_reduction <add>, %57, %cst_23 [1] : vector<128x64xf32> to vector<128xf32>
    %59 = vector.shape_cast %58 : vector<128xf32> to vector<128x1xf32>
    %60 = vector.broadcast %59 : vector<128x1xf32> to vector<128x64xf32>
    %61 = arith.divf %57, %60 : vector<128x64xf32>
    %62 = vector.shape_cast %61 : vector<128x64xf32> to vector<2x64x64xf32>
    %63 = vector.shape_cast %45 : vector<2x64xf32> to vector<2x1x64xf32>
    %64 = vector.broadcast %63 : vector<2x1x64xf32> to vector<2x64x64xf32>
    %65 = arith.mulf %62, %64 : vector<2x64x64xf32>
    %cst_24 = arith.constant dense<0.000000e+00> : vector<2x64xf32>
    %66 = vector.multi_reduction <add>, %65, %cst_24 [2] : vector<2x64x64xf32> to vector<2x64xf32>
    %c0_25 = arith.constant 0 : index
    %c0_26 = arith.constant 0 : index
    %67 = vector.load %arg6[%c0_25, %c0_26] : memref<2x64xf32, #tpu.memory_space<vmem>>, vector<2x64xf32>
    tpu.vector_store %arg6[%c0_25, %c0_26], %66 {strides = array<i32>} : memref<2x64xf32, #tpu.memory_space<vmem>>, vector<2x64xf32>,
    return
  }
}

</mosaic_0001>

<llo_original>
// kernel: tpu_custom_call.1
$region0: #{tpu_custom_call.1}
  #allocation0 [shape = 'u32[]', space=smem, size = 0x4, offset = 0x4, fixed_abs, tag = 'smem constant byte address 0x4 - core index']
  #allocation1 [shape = 'u32[144,128]{1,0:T(1,128)}', space=vmem, size = 0x12000, scoped, tag = 'internal scratch']
  %s0 = inlined_call_operand.vmem [shape: f32[4,2,64], index: 0, kind: input, shape index: {}]
  %s1 = inlined_call_operand.vmem [shape: f32[2,4], index: 1, kind: input, shape index: {}]
  %s2 = inlined_call_operand.vmem [shape: f32[128,16], index: 2, kind: input, shape index: {}]
  %s3 = inlined_call_operand.vmem [shape: f32[16,64], index: 3, kind: input, shape index: {}]
  %s4 = inlined_call_operand.vmem [shape: f32[1,64], index: 4, kind: input, shape index: {}]
  %s5 = inlined_call_operand.vmem [shape: f32[64,64], index: 5, kind: input, shape index: {}]
  %s6 = inlined_call_operand.hbm [shape: f32[2,64], index: 6, kind: output, shape index: {0}]
  %s7 = inlined_call_operand.hbm [shape: f32[2,64], index: 7, kind: output, shape index: {1}]
  %s8 = inlined_call_operand.hbm [shape: f32[2,4], index: 8, kind: output, shape index: {2}]
  %9 = xla_tuple %s6, %s7, %s8
  %s10 = sld [smem:[#allocation0]]
  $region50: #{tpu_custom_call.1} parent=0
    _
  %s12 = ssub.s32 1, %s10
  %s13 = scalar_select 0, %s12, %s10
  $region1: #{tpu_custom_call.1} parent=0
    #allocation2 [shape = 'u8[1024]{0}', space=vmem, size = 0x400, scoped, tag = 'output window, operand 0, single buffered']
    #allocation3 [shape = 's32[1]{0}', space=sflag, size = 0x4, scoped, tag = 'scoped memory for tpu_custom_call.1']
    #allocation4 [shape = 'u8[1024]{0}', space=vmem, size = 0x400, scoped, tag = 'output window, operand 1, single buffered']
    #allocation5 [shape = 's32[1]{0}', space=sflag, size = 0x4, scoped, tag = 'scoped memory for tpu_custom_call.1']
    #allocation6 [shape = 'u8[1024]{0}', space=vmem, size = 0x400, scoped, tag = 'output window, operand 2, single buffered']
    %14 = vsyncpa [#allocation3], 0
    %15 = vsyncpa [#allocation5], 0
    // Predicated region
    $region2: #{tpu_custom_call.1} parent=1 // pred_check
      _
    $region3: #{tpu_custom_call.1} parent=1 // pred_check_branch
      %17 = sbr.rel (0) target = $region5
    $region4: #{tpu_custom_call.1} parent=1 // pred_region
      _
    $region5: #{tpu_custom_call.1} parent=1 // pred_fallthru
      _
    // Predicated region
    $region6: #{tpu_custom_call.1} parent=1 // pred_check
      _
    $region7: #{tpu_custom_call.1} parent=1 // pred_check_branch
      %19 = sbr.rel (0) target = $region9
    $region8: #{tpu_custom_call.1} parent=1 // pred_region
      _
    $region9: #{tpu_custom_call.1} parent=1 // pred_fallthru
      _
    // Predicated region
    $region10: #{tpu_custom_call.1} parent=1 // pred_check
      _
    $region11: #{tpu_custom_call.1} parent=1 // pred_check_branch
      %21 = sbr.rel (0) target = $region13
    $region12: #{tpu_custom_call.1} parent=1 // pred_region
      _
    $region13: #{tpu_custom_call.1} parent=1 // pred_fallthru
      _
    // Predicated region
    $region14: #{tpu_custom_call.1} parent=1 // pred_check
      _
    $region15: #{tpu_custom_call.1} parent=1 // pred_check_branch
      %23 = sbr.rel (0) target = $region17
    $region16: #{tpu_custom_call.1} parent=1 // pred_region
      _
    $region17: #{tpu_custom_call.1} parent=1 // pred_fallthru
      _
    // Predicated region
    $region18: #{tpu_custom_call.1} parent=1 // pred_check
      _
    $region19: #{tpu_custom_call.1} parent=1 // pred_check_branch
      %25 = sbr.rel (0) target = $region21
    $region20: #{tpu_custom_call.1} parent=1 // pred_region
      _
    $region21: #{tpu_custom_call.1} parent=1 // pred_fallthru
      _
    // Predicated region
    $region22: #{tpu_custom_call.1} parent=1 // pred_check
      _
    $region23: #{tpu_custom_call.1} parent=1 // pred_check_branch
      %27 = sbr.rel (0) target = $region25
    $region24: #{tpu_custom_call.1} parent=1 // pred_region
      _
    $region25: #{tpu_custom_call.1} parent=1 // pred_fallthru
      _
    %v28 = vld [vmem:[%s1] sm:$0x3]
    %vm29 = vcmask 25600
    %v30 = vsel %vm29, %v28, -inf
    %31 = vmax.xlane.f32.xlu0 %v30
    %v32 = vpop.xlane.xlu0 %31
    %v33 = vsub.f32 %v28, %v32
    %v34 = vmul.f32 %v33, 1.442695
    %v35 = vpow.pop %v34
    %v36 = vsel %vm29, %v35, 0.0
    %37 = vadd.xlane.f32.xlu0 %v36
    %v38 = vpop.xlane.xlu0 %37
    %v39 = vrcp.pop %v38
    %v40 = vmul.f32 %v35, %v39
    %41 = vst.msk [vmem:[#allocation6] sm:$0x3] %vm29, %v40
    %v42 = vld [vmem:[%s0] sm:$0x3]
    %v43 = vld [vmem:[%s0 + $0x2] sm:$0x3]
    %v44 = vld [vmem:[%s0 + $0x4] sm:$0x3]
    %v45 = vld [vmem:[%s0 + $0x6] sm:$0x3]
    %47 = vset.pattern.permute.xlu0 0
    %48 = vperm.xlu0 %47, %v40
    %v49 = vpop.permute.xlu0 %48
    %v51 = vmul.f32 %v49, %v42
    %52 = vset.pattern.permute.xlu0 1
    %53 = vperm.xlu0 %52, %v40
    %v54 = vpop.permute.xlu0 %53
    %v56 = vmul.f32 %v54, %v43
    %v57 = vadd.f32 %v51, %v56
    %58 = vset.pattern.permute.xlu0 2
    %59 = vperm.xlu0 %58, %v40
    %v60 = vpop.permute.xlu0 %59
    %v62 = vmul.f32 %v60, %v44
    %v63 = vadd.f32 %v57, %v62
    %64 = vset.pattern.permute.xlu0 3
    %65 = vperm.xlu0 %64, %v40
    %v66 = vpop.permute.xlu0 %65
    %v68 = vmul.f32 %v66, %v45
    %v69 = vadd.f32 %v63, %v68
    %v70 = vld [vmem:[%s5] sm:$0xff]
    %v71 = vld [vmem:[%s5 + $0x8] sm:$0xff]
    %v72 = vld [vmem:[%s5 + $0x10] sm:$0xff]
    %v73 = vld [vmem:[%s5 + $0x18] sm:$0xff]
    %v74 = vld [vmem:[%s5 + $0x20] sm:$0xff]
    %v75 = vld [vmem:[%s5 + $0x28] sm:$0xff]
    %v76 = vld [vmem:[%s5 + $0x30] sm:$0xff]
    %v77 = vld [vmem:[%s5 + $0x38] sm:$0xff]
    %vm78 = vcmask 523264
    %v80 = vsel %vm78, %v69, 0
    %82 = vmatprep.subr.mxu0 0.0
    %83 = vmatpush1.msra.mxu0 %v70
    %84 = vmatprep.subr.mxu0 0.0
    %85 = vmatpush1.msra.mxu0 %v71
    %86 = vmatprep.subr.mxu0 0.0
    %87 = vmatpush1.msra.mxu0 %v72
    %88 = vmatprep.subr.mxu0 0.0
    %89 = vmatpush1.msra.mxu0 %v73
    %90 = vmatprep.subr.mxu0 0.0
    %91 = vmatpush1.msra.mxu0 %v74
    %92 = vmatprep.subr.mxu0 0.0
    %93 = vmatpush1.msra.mxu0 %v75
    %94 = vmatprep.subr.mxu0 0.0
    %95 = vmatpush1.msra.mxu0 %v76
    %96 = vmatprep.subr.mxu0 0.0
    %97 = vmatpush1.msra.mxu0 %v77
    %98 = vmatprep.subr.mxu0 0.0
    %99 = vmatpush1.msra.mxu0 0.0
    %100 = vmatprep.subr.mxu0 0.0
    %101 = vmatpush1.msra.mxu0 0.0
    %102 = vmatprep.subr.mxu0 0.0
    %103 = vmatpush1.msra.mxu0 0.0
    %104 = vmatprep.subr.mxu0 0.0
    %105 = vmatpush1.msra.mxu0 0.0
    %106 = vmatprep.subr.mxu0 0.0
    %107 = vmatpush1.msra.mxu0 0.0
    %108 = vmatprep.subr.mxu0 0.0
    %109 = vmatpush1.msra.mxu0 0.0
    %110 = vmatprep.subr.mxu0 0.0
    %111 = vmatpush1.msra.mxu0 0.0
    %112 = vmatprep.subr.mxu0 0.0
    %113 = vmatpush1.msra.mxu0 0.0
    %114 = vmatprep.subr.mxu0 0.0
    %115 = vmatpush1.msra.mxu0 0.0
    %116 = vmatprep.subr.mxu0 0.0
    %117 = vmatpush1.msra.mxu0 0.0
    %118 = vmatprep.subr.mxu0 0.0
    %119 = vmatpush1.msra.mxu0 0.0
    %120 = vmatprep.subr.mxu0 0.0
    %121 = vmatpush1.msra.mxu0 0.0
    %122 = vmatprep.subr.mxu0 0.0
    %123 = vmatpush1.msra.mxu0 0.0
    %124 = vmatprep.subr.mxu0 0.0
    %125 = vmatpush1.msra.mxu0 0.0
    %126 = vmatprep.subr.mxu0 0.0
    %127 = vmatpush1.msra.mxu0 0.0
    %128 = vmatprep.subr.mxu0 0.0
    %129 = vmatpush1.msra.mxu0 0.0
    %130 = vmatprep.subr.mxu0 0.0
    %131 = vmatpush1.msra.mxu0 0.0
    %132 = vmatprep.subr.mxu0 0.0
    %133 = vmatpush1.msra.mxu0 0.0
    %134 = vmatprep.subr.mxu0 0.0
    %135 = vmatpush1.msra.mxu0 0.0
    %136 = vmatprep.subr.mxu0 0.0
    %137 = vmatpush1.msra.mxu0 0.0
    %138 = vmatprep.subr.mxu0 0.0
    %139 = vmatpush1.msra.mxu0 0.0
    %140 = vmatprep.subr.mxu0 0.0
    %141 = vmatpush1.msra.mxu0 0.0
    %142 = vmatprep.subr.mxu0 0.0
    %143 = vmatpush1.msra.mxu0 0.0
    %144 = vmatprep.subr.mxu0 0.0
    %145 = vmatpush1.msra.mxu0 0.0
    %146 = vmatprep.mubr.f32.mxu0 0.0
    %147 = vmatmul.mubr.f32.gmra.mrb[0].mxu0 %v80
    %v148 = vpop.f32.mrb[0].mxu0
    %v149 = vadd.f32 0.0, %v148
    %v150 = vpop.f32.mrb[0].mxu0
    %151 = vdwg.mxu0
    %v152 = vsel %vm29, %v40, 0.0
    %153 = vadd.xlane.f32.xlu0 %v152
    %v154 = vpop.xlane.xlu0 %153
    %v155 = vmul.f32 %v154, 0.01
    %v156 = vadd.f32 %v155, %v149
    %v157 = vmul.f32 %v69, 0.5
    %v158 = vadd.f32 %v156, %v157
    %vm159 = vcmask 517120
    %160 = vst.msk [vmem:[#allocation4] sm:$0x3] %vm159, %v158
    %v161 = vld [vmem:[%s2] sm:$0xff]
    %v162 = vld [vmem:[%s2 + $0x8] sm:$0xff]
    %v163 = vld [vmem:[%s2 + $0x10] sm:$0xff]
    %v164 = vld [vmem:[%s2 + $0x18] sm:$0xff]
    %v165 = vld [vmem:[%s2 + $0x20] sm:$0xff]
    %v166 = vld [vmem:[%s2 + $0x28] sm:$0xff]
    %v167 = vld [vmem:[%s2 + $0x30] sm:$0xff]
    %v168 = vld [vmem:[%s2 + $0x38] sm:$0xff]
    %v169 = vld [vmem:[%s2 + $0x40] sm:$0xff]
    %v170 = vld [vmem:[%s2 + $0x48] sm:$0xff]
    %v171 = vld [vmem:[%s2 + $0x50] sm:$0xff]
    %v172 = vld [vmem:[%s2 + $0x58] sm:$0xff]
    %v173 = vld [vmem:[%s2 + $0x60] sm:$0xff]
    %v174 = vld [vmem:[%s2 + $0x68] sm:$0xff]
    %v175 = vld [vmem:[%s2 + $0x70] sm:$0xff]
    %v176 = vld [vmem:[%s2 + $0x78] sm:$0xff]
    %v177 = vld [vmem:[%s3] sm:$0xff]
    %v178 = vld [vmem:[%s3 + $0x8] sm:$0xff]
    %v179 = vld [vmem:[%s4] sm:$0x1]
    %v181 = vlaneseq
    %v182 = vshrl.u32 %v181, 7
    %v183 = vsub.s32 0, %v182
    %v184 = vrot.slane %v179, %v183
    %vm186 = vcmask 130048
    %v188 = vsel %vm186, %v161, 0
    %v191 = vsel %vm186, %v162, 0
    %v194 = vsel %vm186, %v163, 0
    %v197 = vsel %vm186, %v164, 0
    %v200 = vsel %vm186, %v165, 0
    %v203 = vsel %vm186, %v166, 0
    %v206 = vsel %vm186, %v167, 0
    %v209 = vsel %vm186, %v168, 0
    %v212 = vsel %vm186, %v169, 0
    %v215 = vsel %vm186, %v170, 0
    %v218 = vsel %vm186, %v171, 0
    %v221 = vsel %vm186, %v172, 0
    %v224 = vsel %vm186, %v173, 0
    %v227 = vsel %vm186, %v174, 0
    %v230 = vsel %vm186, %v175, 0
    %v233 = vsel %vm186, %v176, 0
    %235 = vmatprep.subr.mxu0 0.0
    %236 = vmatpush1.msra.mxu0 %v177
    %237 = vmatprep.subr.mxu0 0.0
    %238 = vmatpush1.msra.mxu0 %v178
    %239 = vmatprep.subr.mxu0 0.0
    %240 = vmatpush1.msra.mxu0 0.0
    %241 = vmatprep.subr.mxu0 0.0
    %242 = vmatpush1.msra.mxu0 0.0
    %243 = vmatprep.subr.mxu0 0.0
    %244 = vmatpush1.msra.mxu0 0.0
    %245 = vmatprep.subr.mxu0 0.0
    %246 = vmatpush1.msra.mxu0 0.0
    %247 = vmatprep.subr.mxu0 0.0
    %248 = vmatpush1.msra.mxu0 0.0
    %249 = vmatprep.subr.mxu0 0.0
    %250 = vmatpush1.msra.mxu0 0.0
    %251 = vmatprep.subr.mxu0 0.0
    %252 = vmatpush1.msra.mxu0 0.0
    %253 = vmatprep.subr.mxu0 0.0
    %254 = vmatpush1.msra.mxu0 0.0
    %255 = vmatprep.subr.mxu0 0.0
    %256 = vmatpush1.msra.mxu0 0.0
    %257 = vmatprep.subr.mxu0 0.0
    %258 = vmatpush1.msra.mxu0 0.0
    %259 = vmatprep.subr.mxu0 0.0
    %260 = vmatpush1.msra.mxu0 0.0
    %261 = vmatprep.subr.mxu0 0.0
    %262 = vmatpush1.msra.mxu0 0.0
    %263 = vmatprep.subr.mxu0 0.0
    %264 = vmatpush1.msra.mxu0 0.0
    %265 = vmatprep.subr.mxu0 0.0
    %266 = vmatpush1.msra.mxu0 0.0
    %267 = vmatprep.subr.mxu0 0.0
    %268 = vmatpush1.msra.mxu0 0.0
    %269 = vmatprep.subr.mxu0 0.0
    %270 = vmatpush1.msra.mxu0 0.0
    %271 = vmatprep.subr.mxu0 0.0
    %272 = vmatpush1.msra.mxu0 0.0
    %273 = vmatprep.subr.mxu0 0.0
    %274 = vmatpush1.msra.mxu0 0.0
    %275 = vmatprep.subr.mxu0 0.0
    %276 = vmatpush1.msra.mxu0 0.0
    %277 = vmatprep.subr.mxu0 0.0
    %278 = vmatpush1.msra.mxu0 0.0
    %279 = vmatprep.subr.mxu0 0.0
    %280 = vmatpush1.msra.mxu0 0.0
    %281 = vmatprep.subr.mxu0 0.0
    %282 = vmatpush1.msra.mxu0 0.0
    %283 = vmatprep.subr.mxu0 0.0
    %284 = vmatpush1.msra.mxu0 0.0
    %285 = vmatprep.subr.mxu0 0.0
    %286 = vmatpush1.msra.mxu0 0.0
    %287 = vmatprep.subr.mxu0 0.0
    %288 = vmatpush1.msra.mxu0 0.0
    %289 = vmatprep.subr.mxu0 0.0
    %290 = vmatpush1.msra.mxu0 0.0
    %291 = vmatprep.subr.mxu0 0.0
    %292 = vmatpush1.msra.mxu0 0.0
    %293 = vmatprep.subr.mxu0 0.0
    %294 = vmatpush1.msra.mxu0 0.0
    %295 = vmatprep.subr.mxu0 0.0
    %296 = vmatpush1.msra.mxu0 0.0
    %297 = vmatprep.subr.mxu0 0.0
    %298 = vmatpush1.msra.mxu0 0.0
    %299 = vmatprep.mubr.f32.mxu0 0.0
    %300 = vmatmul.mubr.f32.gmra.mrb[0].mxu0 %v188
    %v301 = vpop.f32.mrb[0].mxu0
    %v302 = vadd.f32 %v184, %v301
    %v303 = vpop.f32.mrb[0].mxu0
    %304 = vmatprep.mubr.f32.mxu0 0.0
    %305 = vmatmul.mubr.f32.gmra.mrb[0].mxu0 %v191
    %v306 = vpop.f32.mrb[0].mxu0
    %v307 = vadd.f32 %v184, %v306
    %v308 = vpop.f32.mrb[0].mxu0
    %309 = vmatprep.mubr.f32.mxu0 0.0
    %310 = vmatmul.mubr.f32.gmra.mrb[0].mxu0 %v194
    %v311 = vpop.f32.mrb[0].mxu0
    %v312 = vadd.f32 %v184, %v311
    %v313 = vpop.f32.mrb[0].mxu0
    %314 = vmatprep.mubr.f32.mxu0 0.0
    %315 = vmatmul.mubr.f32.gmra.mrb[0].mxu0 %v197
    %v316 = vpop.f32.mrb[0].mxu0
    %v317 = vadd.f32 %v184, %v316
    %v318 = vpop.f32.mrb[0].mxu0
    %319 = vmatprep.mubr.f32.mxu0 0.0
    %320 = vmatmul.mubr.f32.gmra.mrb[0].mxu0 %v200
    %v321 = vpop.f32.mrb[0].mxu0
    %v322 = vadd.f32 %v184, %v321
    %v323 = vpop.f32.mrb[0].mxu0
    %324 = vmatprep.mubr.f32.mxu0 0.0
    %325 = vmatmul.mubr.f32.gmra.mrb[0].mxu0 %v203
    %v326 = vpop.f32.mrb[0].mxu0
    %v327 = vadd.f32 %v184, %v326
    %v328 = vpop.f32.mrb[0].mxu0
    %329 = vmatprep.mubr.f32.mxu0 0.0
    %330 = vmatmul.mubr.f32.gmra.mrb[0].mxu0 %v206
    %v331 = vpop.f32.mrb[0].mxu0
    %v332 = vadd.f32 %v184, %v331
    %v333 = vpop.f32.mrb[0].mxu0
    %334 = vmatprep.mubr.f32.mxu0 0.0
    %335 = vmatmul.mubr.f32.gmra.mrb[0].mxu0 %v209
    %v336 = vpop.f32.mrb[0].mxu0
    %v337 = vadd.f32 %v184, %v336
    %v338 = vpop.f32.mrb[0].mxu0
    %339 = vmatprep.mubr.f32.mxu0 0.0
    %340 = vmatmul.mubr.f32.gmra.mrb[0].mxu0 %v212
    %v341 = vpop.f32.mrb[0].mxu0
    %v342 = vadd.f32 %v184, %v341
    %v343 = vpop.f32.mrb[0].mxu0
    %344 = vmatprep.mubr.f32.mxu0 0.0
    %345 = vmatmul.mubr.f32.gmra.mrb[0].mxu0 %v215
    %v346 = vpop.f32.mrb[0].mxu0
    %v347 = vadd.f32 %v184, %v346
    %v348 = vpop.f32.mrb[0].mxu0
    %349 = vmatprep.mubr.f32.mxu0 0.0
    %350 = vmatmul.mubr.f32.gmra.mrb[0].mxu0 %v218
    %v351 = vpop.f32.mrb[0].mxu0
    %v352 = vadd.f32 %v184, %v351
    %v353 = vpop.f32.mrb[0].mxu0
    %354 = vmatprep.mubr.f32.mxu0 0.0
    %355 = vmatmul.mubr.f32.gmra.mrb[0].mxu0 %v221
    %v356 = vpop.f32.mrb[0].mxu0
    %v357 = vadd.f32 %v184, %v356
    %v358 = vpop.f32.mrb[0].mxu0
    %359 = vmatprep.mubr.f32.mxu0 0.0
    %360 = vmatmul.mubr.f32.gmra.mrb[0].mxu0 %v224
    %v361 = vpop.f32.mrb[0].mxu0
    %v362 = vadd.f32 %v184, %v361
    %v363 = vpop.f32.mrb[0].mxu0
    %364 = vmatprep.mubr.f32.mxu0 0.0
    %365 = vmatmul.mubr.f32.gmra.mrb[0].mxu0 %v227
    %v366 = vpop.f32.mrb[0].mxu0
    %v367 = vadd.f32 %v184, %v366
    %v368 = vpop.f32.mrb[0].mxu0
    %369 = vmatprep.mubr.f32.mxu0 0.0
    %370 = vmatmul.mubr.f32.gmra.mrb[0].mxu0 %v230
    %v371 = vpop.f32.mrb[0].mxu0
    %v372 = vadd.f32 %v184, %v371
    %v373 = vpop.f32.mrb[0].mxu0
    %374 = vmatprep.mubr.f32.mxu0 0.0
    %375 = vmatmul.mubr.f32.gmra.mrb[0].mxu0 %v233
    %v376 = vpop.f32.mrb[0].mxu0
    %v377 = vadd.f32 %v184, %v376
    %v378 = vpop.f32.mrb[0].mxu0
    %379 = vdwg.mxu0
    %v380 = vsel %vm78, %v302, -inf
    %381 = vmax.xlane.f32.xlu0 %v380
    %v382 = vpop.xlane.xlu0 %381
    %v383 = vsel %vm78, %v307, -inf
    %384 = vmax.xlane.f32.xlu0 %v383
    %v385 = vpop.xlane.xlu0 %384
    %v386 = vsel %vm78, %v312, -inf
    %387 = vmax.xlane.f32.xlu0 %v386
    %v388 = vpop.xlane.xlu0 %387
    %v389 = vsel %vm78, %v317, -inf
    %390 = vmax.xlane.f32.xlu0 %v389
    %v391 = vpop.xlane.xlu0 %390
    %v392 = vsel %vm78, %v322, -inf
    %393 = vmax.xlane.f32.xlu0 %v392
    %v394 = vpop.xlane.xlu0 %393
    %v395 = vsel %vm78, %v327, -inf
    %396 = vmax.xlane.f32.xlu0 %v395
    %v397 = vpop.xlane.xlu0 %396
    %v398 = vsel %vm78, %v332, -inf
    %399 = vmax.xlane.f32.xlu0 %v398
    %v400 = vpop.xlane.xlu0 %399
    %v401 = vsel %vm78, %v337, -inf
    %402 = vmax.xlane.f32.xlu0 %v401
    %v403 = vpop.xlane.xlu0 %402
    %v404 = vsel %vm78, %v342, -inf
    %405 = vmax.xlane.f32.xlu0 %v404
    %v406 = vpop.xlane.xlu0 %405
    %v407 = vsel %vm78, %v347, -inf
    %408 = vmax.xlane.f32.xlu0 %v407
    %v409 = vpop.xlane.xlu0 %408
    %v410 = vsel %vm78, %v352, -inf
    %411 = vmax.xlane.f32.xlu0 %v410
    %v412 = vpop.xlane.xlu0 %411
    %v413 = vsel %vm78, %v357, -inf
    %414 = vmax.xlane.f32.xlu0 %v413
    %v415 = vpop.xlane.xlu0 %414
    %v416 = vsel %vm78, %v362, -inf
    %417 = vmax.xlane.f32.xlu0 %v416
    %v418 = vpop.xlane.xlu0 %417
    %v419 = vsel %vm78, %v367, -inf
    %420 = vmax.xlane.f32.xlu0 %v419
    %v421 = vpop.xlane.xlu0 %420
    %v422 = vsel %vm78, %v372, -inf
    %423 = vmax.xlane.f32.xlu0 %v422
    %v424 = vpop.xlane.xlu0 %423
    %v425 = vsel %vm78, %v377, -inf
    %426 = vmax.xlane.f32.xlu0 %v425
    %v427 = vpop.xlane.xlu0 %426
    %v428 = vsub.f32 %v302, %v382
    %v429 = vsub.f32 %v307, %v385
    %v430 = vsub.f32 %v312, %v388
    %v431 = vsub.f32 %v317, %v391
    %v432 = vsub.f32 %v322, %v394
    %v433 = vsub.f32 %v327, %v397
    %v434 = vsub.f32 %v332, %v400
    %v435 = vsub.f32 %v337, %v403
    %v436 = vsub.f32 %v342, %v406
    %v437 = vsub.f32 %v347, %v409
    %v438 = vsub.f32 %v352, %v412
    %v439 = vsub.f32 %v357, %v415
    %v440 = vsub.f32 %v362, %v418
    %v441 = vsub.f32 %v367, %v421
    %v442 = vsub.f32 %v372, %v424
    %v443 = vsub.f32 %v377, %v427
    %v444 = vmul.f32 %v428, 1.442695
    %v445 = vpow.pop %v444
    %v446 = vmul.f32 %v429, 1.442695
    %v447 = vpow.pop %v446
    %v448 = vmul.f32 %v430, 1.442695
    %v449 = vpow.pop %v448
    %v450 = vmul.f32 %v431, 1.442695
    %v451 = vpow.pop %v450
    %v452 = vmul.f32 %v432, 1.442695
    %v453 = vpow.pop %v452
    %v454 = vmul.f32 %v433, 1.442695
    %v455 = vpow.pop %v454
    %v456 = vmul.f32 %v434, 1.442695
    %v457 = vpow.pop %v456
    %v458 = vmul.f32 %v435, 1.442695
    %v459 = vpow.pop %v458
    %v460 = vmul.f32 %v436, 1.442695
    %v461 = vpow.pop %v460
    %v462 = vmul.f32 %v437, 1.442695
    %v463 = vpow.pop %v462
    %v464 = vmul.f32 %v438, 1.442695
    %v465 = vpow.pop %v464
    %v466 = vmul.f32 %v439, 1.442695
    %v467 = vpow.pop %v466
    %v468 = vmul.f32 %v440, 1.442695
    %v469 = vpow.pop %v468
    %v470 = vmul.f32 %v441, 1.442695
    %v471 = vpow.pop %v470
    %v472 = vmul.f32 %v442, 1.442695
    %v473 = vpow.pop %v472
    %v474 = vmul.f32 %v443, 1.442695
    %v475 = vpow.pop %v474
    %v476 = vsel %vm78, %v445, 0.0
    %477 = vadd.xlane.f32.xlu0 %v476
    %v478 = vpop.xlane.xlu0 %477
    %v479 = vsel %vm78, %v447, 0.0
    %480 = vadd.xlane.f32.xlu0 %v479
    %v481 = vpop.xlane.xlu0 %480
    %v482 = vsel %vm78, %v449, 0.0
    %483 = vadd.xlane.f32.xlu0 %v482
    %v484 = vpop.xlane.xlu0 %483
    %v485 = vsel %vm78, %v451, 0.0
    %486 = vadd.xlane.f32.xlu0 %v485
    %v487 = vpop.xlane.xlu0 %486
    %v488 = vsel %vm78, %v453, 0.0
    %489 = vadd.xlane.f32.xlu0 %v488
    %v490 = vpop.xlane.xlu0 %489
    %v491 = vsel %vm78, %v455, 0.0
    %492 = vadd.xlane.f32.xlu0 %v491
    %v493 = vpop.xlane.xlu0 %492
    %v494 = vsel %vm78, %v457, 0.0
    %495 = vadd.xlane.f32.xlu0 %v494
    %v496 = vpop.xlane.xlu0 %495
    %v497 = vsel %vm78, %v459, 0.0
    %498 = vadd.xlane.f32.xlu0 %v497
    %v499 = vpop.xlane.xlu0 %498
    %v500 = vsel %vm78, %v461, 0.0
    %501 = vadd.xlane.f32.xlu0 %v500
    %v502 = vpop.xlane.xlu0 %501
    %v503 = vsel %vm78, %v463, 0.0
    %504 = vadd.xlane.f32.xlu0 %v503
    %v505 = vpop.xlane.xlu0 %504
    %v506 = vsel %vm78, %v465, 0.0
    %507 = vadd.xlane.f32.xlu0 %v506
    %v508 = vpop.xlane.xlu0 %507
    %v509 = vsel %vm78, %v467, 0.0
    %510 = vadd.xlane.f32.xlu0 %v509
    %v511 = vpop.xlane.xlu0 %510
    %v512 = vsel %vm78, %v469, 0.0
    %513 = vadd.xlane.f32.xlu0 %v512
    %v514 = vpop.xlane.xlu0 %513
    %v515 = vsel %vm78, %v471, 0.0
    %516 = vadd.xlane.f32.xlu0 %v515
    %v517 = vpop.xlane.xlu0 %516
    %v518 = vsel %vm78, %v473, 0.0
    %519 = vadd.xlane.f32.xlu0 %v518
    %v520 = vpop.xlane.xlu0 %519
    %v521 = vsel %vm78, %v475, 0.0
    %522 = vadd.xlane.f32.xlu0 %v521
    %v523 = vpop.xlane.xlu0 %522
    %v524 = vrcp.pop %v478
    %v525 = vmul.f32 %v445, %v524
    %v526 = vrcp.pop %v481
    %v527 = vmul.f32 %v447, %v526
    %v528 = vrcp.pop %v484
    %v529 = vmul.f32 %v449, %v528
    %v530 = vrcp.pop %v487
    %v531 = vmul.f32 %v451, %v530
    %v532 = vrcp.pop %v490
    %v533 = vmul.f32 %v453, %v532
    %v534 = vrcp.pop %v493
    %v535 = vmul.f32 %v455, %v534
    %v536 = vrcp.pop %v496
    %v537 = vmul.f32 %v457, %v536
    %v538 = vrcp.pop %v499
    %v539 = vmul.f32 %v459, %v538
    %v540 = vrcp.pop %v502
    %v541 = vmul.f32 %v461, %v540
    %v542 = vrcp.pop %v505
    %v543 = vmul.f32 %v463, %v542
    %v544 = vrcp.pop %v508
    %v545 = vmul.f32 %v465, %v544
    %v546 = vrcp.pop %v511
    %v547 = vmul.f32 %v467, %v546
    %v548 = vrcp.pop %v514
    %v549 = vmul.f32 %v469, %v548
    %v550 = vrcp.pop %v517
    %v551 = vmul.f32 %v471, %v550
    %v552 = vrcp.pop %v520
    %v553 = vmul.f32 %v473, %v552
    %v554 = vrcp.pop %v523
    %v555 = vmul.f32 %v475, %v554
    %v558 = vunpack.c.l.s4 1966171168
    %v559 = vunpack.c.0.s8 %v558
    %v560 = vlaneseq
    %v561 = vshrl.u32 %v560, 7
    %v562 = vsub.s32 %v559, %v561
    %v563 = vrot.slane %v158, %v562
    %v564 = vcombine.high %v563, %v563
    %v566 = vunpack.c.l.s4 1966171168
    %v567 = vunpack.c.0.s8 %v566
    %v568 = vlaneseq
    %v569 = vshrl.u32 %v568, 7
    %v570 = vsub.s32 %v567, %v569
    %v571 = vrot.slane %v563, %v570
    %v573 = vunpack.c.l.s4 1966171168
    %v574 = vunpack.c.0.s8 %v573
    %v575 = vlaneseq
    %v576 = vshrl.u32 %v575, 7
    %v577 = vsub.s32 %v574, %v576
    %v578 = vrot.slane %v564, %v577
    %v579 = vlaneseq
    %v580 = vshrl.u32 %v579, 7
    %v581 = vsub.s32 0, %v580
    %v582 = vrot.slane %v571, %v581
    %v583 = vlaneseq
    %v584 = vshrl.u32 %v583, 7
    %v585 = vsub.s32 0, %v584
    %v586 = vrot.slane %v578, %v585
    %v589 = vmul.f32 %v525, %v582
    %v590 = vmul.f32 %v527, %v582
    %v591 = vmul.f32 %v529, %v582
    %v592 = vmul.f32 %v531, %v582
    %v593 = vmul.f32 %v533, %v582
    %v594 = vmul.f32 %v535, %v582
    %v595 = vmul.f32 %v537, %v582
    %v596 = vmul.f32 %v539, %v582
    %v597 = vmul.f32 %v541, %v586
    %v598 = vmul.f32 %v543, %v586
    %v599 = vmul.f32 %v545, %v586
    %v600 = vmul.f32 %v547, %v586
    %v601 = vmul.f32 %v549, %v586
    %v602 = vmul.f32 %v551, %v586
    %v603 = vmul.f32 %v553, %v586
    %v604 = vmul.f32 %v555, %v586
    %v605 = vsel %vm78, %v589, 0.0
    %606 = vadd.xlane.f32.xlu0 %v605
    %v607 = vpop.xlane.xlu0 %606
    %v608 = vsel %vm78, %v590, 0.0
    %609 = vadd.xlane.f32.xlu0 %v608
    %v610 = vpop.xlane.xlu0 %609
    %v611 = vsel %vm78, %v591, 0.0
    %612 = vadd.xlane.f32.xlu0 %v611
    %v613 = vpop.xlane.xlu0 %612
    %v614 = vsel %vm78, %v592, 0.0
    %615 = vadd.xlane.f32.xlu0 %v614
    %v616 = vpop.xlane.xlu0 %615
    %v617 = vsel %vm78, %v593, 0.0
    %618 = vadd.xlane.f32.xlu0 %v617
    %v619 = vpop.xlane.xlu0 %618
    %v620 = vsel %vm78, %v594, 0.0
    %621 = vadd.xlane.f32.xlu0 %v620
    %v622 = vpop.xlane.xlu0 %621
    %v623 = vsel %vm78, %v595, 0.0
    %624 = vadd.xlane.f32.xlu0 %v623
    %v625 = vpop.xlane.xlu0 %624
    %v626 = vsel %vm78, %v596, 0.0
    %627 = vadd.xlane.f32.xlu0 %v626
    %v628 = vpop.xlane.xlu0 %627
    %v629 = vsel %vm78, %v597, 0.0
    %630 = vadd.xlane.f32.xlu0 %v629
    %v631 = vpop.xlane.xlu0 %630
    %v632 = vsel %vm78, %v598, 0.0
    %633 = vadd.xlane.f32.xlu0 %v632
    %v634 = vpop.xlane.xlu0 %633
    %v635 = vsel %vm78, %v599, 0.0
    %636 = vadd.xlane.f32.xlu0 %v635
    %v637 = vpop.xlane.xlu0 %636
    %v638 = vsel %vm78, %v600, 0.0
    %639 = vadd.xlane.f32.xlu0 %v638
    %v640 = vpop.xlane.xlu0 %639
    %v641 = vsel %vm78, %v601, 0.0
    %642 = vadd.xlane.f32.xlu0 %v641
    %v643 = vpop.xlane.xlu0 %642
    %v644 = vsel %vm78, %v602, 0.0
    %645 = vadd.xlane.f32.xlu0 %v644
    %v646 = vpop.xlane.xlu0 %645
    %v647 = vsel %vm78, %v603, 0.0
    %648 = vadd.xlane.f32.xlu0 %v647
    %v649 = vpop.xlane.xlu0 %648
    %v650 = vsel %vm78, %v604, 0.0
    %651 = vadd.xlane.f32.xlu0 %v650
    %v652 = vpop.xlane.xlu0 %651
    %v669 = vlaneseq
    %v670 = vand.u32 %v669, 127
    %v671 = vlaneseq
    %v672 = vshrl.u32 %v671, 7
    %v673 = vsub.s32 %v670, %v672
    %v674 = vrot.slane %v607, %v673
    %v675 = vadd.s32 %v670, 4294967288
    %v676 = vlaneseq
    %v677 = vshrl.u32 %v676, 7
    %v678 = vsub.s32 %v675, %v677
    %v679 = vrot.slane %v610, %v678
    %vm680 = vcmask 130112
    %v681 = vsel %vm680, %v679, %v674
    %v682 = vadd.s32 %v670, 4294967280
    %v683 = vlaneseq
    %v684 = vshrl.u32 %v683, 7
    %v685 = vsub.s32 %v682, %v684
    %v686 = vrot.slane %v613, %v685
    %vm687 = vcmask 195712
    %v688 = vsel %vm687, %v686, %v681
    %v689 = vadd.s32 %v670, 4294967272
    %v690 = vlaneseq
    %v691 = vshrl.u32 %v690, 7
    %v692 = vsub.s32 %v689, %v691
    %v693 = vrot.slane %v616, %v692
    %vm694 = vcmask 261312
    %v695 = vsel %vm694, %v693, %v688
    %v696 = vadd.s32 %v670, 4294967264
    %v697 = vlaneseq
    %v698 = vshrl.u32 %v697, 7
    %v699 = vsub.s32 %v696, %v698
    %v700 = vrot.slane %v619, %v699
    %vm701 = vcmask 326912
    %v702 = vsel %vm701, %v700, %v695
    %v703 = vadd.s32 %v670, 4294967256
    %v704 = vlaneseq
    %v705 = vshrl.u32 %v704, 7
    %v706 = vsub.s32 %v703, %v705
    %v707 = vrot.slane %v622, %v706
    %vm708 = vcmask 392512
    %v709 = vsel %vm708, %v707, %v702
    %v710 = vadd.s32 %v670, 4294967248
    %v711 = vlaneseq
    %v712 = vshrl.u32 %v711, 7
    %v713 = vsub.s32 %v710, %v712
    %v714 = vrot.slane %v625, %v713
    %vm715 = vcmask 458112
    %v716 = vsel %vm715, %v714, %v709
    %v717 = vadd.s32 %v670, 4294967240
    %v718 = vlaneseq
    %v719 = vshrl.u32 %v718, 7
    %v720 = vsub.s32 %v717, %v719
    %v721 = vrot.slane %v628, %v720
    %vm722 = vcmask 523712
    %v723 = vsel %vm722, %v721, %v716
    %v724 = vlaneseq
    %v725 = vshrl.u32 %v724, 7
    %v726 = vsub.s32 %v670, %v725
    %v727 = vrot.slane %v631, %v726
    %v728 = vlaneseq
    %v729 = vshrl.u32 %v728, 7
    %v730 = vsub.s32 %v675, %v729
    %v731 = vrot.slane %v634, %v730
    %v732 = vsel %vm680, %v731, %v727
    %v733 = vlaneseq
    %v734 = vshrl.u32 %v733, 7
    %v735 = vsub.s32 %v682, %v734
    %v736 = vrot.slane %v637, %v735
    %v737 = vsel %vm687, %v736, %v732
    %v738 = vlaneseq
    %v739 = vshrl.u32 %v738, 7
    %v740 = vsub.s32 %v689, %v739
    %v741 = vrot.slane %v640, %v740
    %v742 = vsel %vm694, %v741, %v737
    %v743 = vlaneseq
    %v744 = vshrl.u32 %v743, 7
    %v745 = vsub.s32 %v696, %v744
    %v746 = vrot.slane %v643, %v745
    %v747 = vsel %vm701, %v746, %v742
    %v748 = vlaneseq
    %v749 = vshrl.u32 %v748, 7
    %v750 = vsub.s32 %v703, %v749
    %v751 = vrot.slane %v646, %v750
    %v752 = vsel %vm708, %v751, %v747
    %v753 = vlaneseq
    %v754 = vshrl.u32 %v753, 7
    %v755 = vsub.s32 %v710, %v754
    %v756 = vrot.slane %v649, %v755
    %v757 = vsel %vm715, %v756, %v752
    %v758 = vlaneseq
    %v759 = vshrl.u32 %v758, 7
    %v760 = vsub.s32 %v717, %v759
    %v761 = vrot.slane %v652, %v760
    %v762 = vsel %vm722, %v761, %v757
    %vm763 = vcmask 1041409
    %v764 = vsel %vm763, %v762, %v723
    %766 = vst.msk [vmem:[#allocation2] sm:$0x3] %vm159, %v764
    // Predicated region
    $region26: #{tpu_custom_call.1} parent=1 // pred_check
      _
    $region27: #{tpu_custom_call.1} parent=1 // pred_check_branch
      %768 = sbr.rel (0) target = $region29
    $region28: #{tpu_custom_call.1} parent=1 // pred_region
      %s770 = ssub.s32 32, 32
      %771 = vsyncadd [#allocation3], %s770
      %s773 = sshll.u32 [#allocation2], 4
      %s774 = int_to_ptr.vmem [resolvable:$true] %s773
      %776 = dma.vmem_to_hbm [thread:$0]  %s774, 32, %s6, [#allocation3]
    $region29: #{tpu_custom_call.1} parent=1 // pred_fallthru
      _
    // Predicated region
    $region30: #{tpu_custom_call.1} parent=1 // pred_check
      _
    $region31: #{tpu_custom_call.1} parent=1 // pred_check_branch
      %778 = sbr.rel (0) target = $region33
    $region32: #{tpu_custom_call.1} parent=1 // pred_region
      %s780 = ssub.s32 32, 32
      %781 = vsyncadd [#allocation5], %s780
      %s783 = sshll.u32 [#allocation4], 4
      %s784 = int_to_ptr.vmem [resolvable:$true] %s783
      %786 = dma.vmem_to_hbm [thread:$0]  %s784, 32, %s7, [#allocation5]
    $region33: #{tpu_custom_call.1} parent=1 // pred_fallthru
      _
    // Predicated region
    $region34: #{tpu_custom_call.1} parent=1 // pred_check
      _
    $region35: #{tpu_custom_call.1} parent=1 // pred_check_branch
      %788 = sbr.rel (0) target = $region37
    $region36: #{tpu_custom_call.1} parent=1 // pred_region
      %s790 = ssub.s32 32, 32
      %791 = vsyncadd [#allocation5], %s790
      %s793 = sshll.u32 [#allocation6], 4
      %s794 = int_to_ptr.vmem [resolvable:$true] %s793
      %796 = dma.vmem_to_hbm [thread:$0]  %s794, 32, %s8, [#allocation5]
    $region37: #{tpu_custom_call.1} parent=1 // pred_fallthru
      _
    // Predicated region
    $region38: #{tpu_custom_call.1} parent=1 // pred_check
      _
    $region39: #{tpu_custom_call.1} parent=1 // pred_check_branch
      %798 = sbr.rel (0) target = $region41
    $region40: #{tpu_custom_call.1} parent=1 // pred_region
      %799 = dma.done [#allocation3], 32
    $region41: #{tpu_custom_call.1} parent=1 // pred_fallthru
      _
    // Predicated region
    $region42: #{tpu_custom_call.1} parent=1 // pred_check
      _
    $region43: #{tpu_custom_call.1} parent=1 // pred_check_branch
      %801 = sbr.rel (0) target = $region45
    $region44: #{tpu_custom_call.1} parent=1 // pred_region
      %802 = dma.done [#allocation5], 32
    $region45: #{tpu_custom_call.1} parent=1 // pred_fallthru
      _
    // Predicated region
    $region46: #{tpu_custom_call.1} parent=1 // pred_check
      _
    $region47: #{tpu_custom_call.1} parent=1 // pred_check_branch
      %804 = sbr.rel (0) target = $region49
    $region48: #{tpu_custom_call.1} parent=1 // pred_region
      %805 = dma.done [#allocation5], 32
    $region49: #{tpu_custom_call.1} parent=1 // pred_fallthru
      _
    %806 = vsyncpa [#allocation3], 1
    %807 = vsyncpa [#allocation5], 1

</llo_original>
